<compile_context>
chip_gen: v7x
topology: tpu7x:2x2x1
jax: 0.10.0
libtpu: 0.0.40
codegen_flags: <defaults>
</compile_context>

<pallas_src>
import numpy as np
import jax
import jax.numpy as jnp
from jax.experimental import pallas as pl
from jax.experimental.pallas import tpu as pltpu


def _round_up(x, m):
    return ((x + m - 1) // m) * m


def _embed_kernel(pe_ref, x_ref, w_pe_ref, w_x_ref, b_ref, out_ref):
    # (TM, K) @ (K, E) + (TM, F) @ (F, E) + bias, accumulated in f32.
    acc = jnp.dot(pe_ref[...], w_pe_ref[...], preferred_element_type=jnp.float32)
    acc = acc + jnp.dot(x_ref[...], w_x_ref[...], preferred_element_type=jnp.float32)
    out_ref[...] = (acc + b_ref[...]).astype(out_ref.dtype)


def laplacian_graph_embeddings(node_features, adjacency, params, number_eigenvectors,
                               *, row_tile=512, compute_dtype=jnp.float32):
    """JAX/Pallas equivalent of LaplacianGraphEmbeddings.forward.

    node_features: (B, N, F) float  (graph.ndata['feature'].float())
    adjacency:     (B, N, N) float  dense adjacency matrices
    Returns (node_embeddings (B, N, E), adjacency_matrices (B, N, N)).
    """
    B, N, F_ = node_features.shape
    K = number_eigenvectors

    # ---- glue: Laplacian positional encodings (dgl.lap_pe semantics) --------
    # Eigenvectors of L = I - D^{-1/2} A D^{-1/2}, K smallest non-trivial
    # (skip index 0). Eigenvector sign is inherently ambiguous; we follow
    # jnp.linalg.eigh's convention.
    # TODO(synk): eigendecomposition has no Pallas equivalent; done in plain JAX.
    deg = jnp.sum(adjacency, axis=-1)                                    # (B, N)
    inv_sqrt_d = jnp.where(deg > 0, 1.0 / jnp.sqrt(jnp.maximum(deg, 1e-12)), 0.0)
    norm_adj = adjacency * inv_sqrt_d[:, :, None] * inv_sqrt_d[:, None, :]
    lap = jnp.eye(N, dtype=jnp.float32)[None] - norm_adj                 # (B, N, N)
    _, eigvecs = jnp.linalg.eigh(lap)                                    # ascending eigvals
    k_avail = min(K, max(N - 1, 0))
    pe = eigvecs[:, :, 1:1 + k_avail].astype(jnp.float32)                # (B, N, k_avail)
    if k_avail < K:
        # dgl.lap_pe zero-pads when K > N-1; mirror that to keep shapes static.
        pe = jnp.pad(pe, ((0, 0), (0, 0), (0, K - k_avail)))

    # ---- parameters ----------------------------------------------------------
    # nn.Linear stores weight as (out, in); transpose once to (in, out).
    w_pe = jnp.asarray(params["w_pe"]).T.astype(compute_dtype)           # (K, E)
    w_x = jnp.asarray(params["w_x"]).T.astype(compute_dtype)             # (F, E)
    E = w_pe.shape[1]
    b_cat = (jnp.asarray(params["b_pe"], jnp.float32)
             + jnp.asarray(params["b_x"], jnp.float32))[None, :]         # (1, E), f32

    # Collapse batch into the row axis (contiguous reshape: no HBM copy).
    pe2 = pe.astype(compute_dtype).reshape(B * N, K)
    x2 = node_features.astype(compute_dtype).reshape(B * N, F_)

    R = B * N
    # Adaptive row tile: no larger than needed, multiple of 8 (sublane), and
    # split into >= 2 grid steps when possible so v7x's two cores share work.
    TM = min(row_tile, _round_up(R, 8))
    if R > 8 and pl.cdiv(R, TM) < 2:
        TM = _round_up(pl.cdiv(R, 2), 8)
    TM = max(TM, 8)
    grid = (pl.cdiv(R, TM),)

    in_itemsize = np.dtype(compute_dtype).itemsize
    cost = pl.CostEstimate(
        flops=2 * R * (K + F_) * E,
        transcendentals=0,
        bytes_accessed=(R * (K + F_) * in_itemsize            # pe + x tiles
                        + (K + F_) * E * in_itemsize           # weights
                        + E * 4                                # bias
                        + R * E * 4),                          # output
    )

    out = pl.pallas_call(
        _embed_kernel,
        out_shape=jax.ShapeDtypeStruct((R, E), jnp.float32),
        grid_spec=pltpu.PrefetchScalarGridSpec(
            num_scalar_prefetch=0,
            grid=grid,
            in_specs=[
                pl.BlockSpec((TM, K), lambda i: (i, 0)),    # pe row tile
                pl.BlockSpec((TM, F_), lambda i: (i, 0)),   # node-feature row tile
                pl.BlockSpec((K, E), lambda i: (0, 0)),     # w_pe (resident)
                pl.BlockSpec((F_, E), lambda i: (0, 0)),    # w_x (resident)
                pl.BlockSpec((1, E), lambda i: (0, 0)),     # merged bias (resident)
            ],
            out_specs=pl.BlockSpec((TM, E), lambda i: (i, 0)),
        ),
        compiler_params=pltpu.CompilerParams(
            dimension_semantics=("parallel",),
        ),
        cost_estimate=cost,
    )(pe2, x2, w_pe, w_x, b_cat)

    node_embeddings = out.reshape(B, N, E)
    # Adjacency matrices are returned as-is (already stacked densely).
    return node_embeddings, adjacency


def init_params(key, node_features_size, number_eigenvectors, embedding_size):
    """Deterministic init matching nn.Linear's shapes: weight (out, in), bias (out,)."""
    k1, k2, k3, k4 = jax.random.split(key, 4)
    bound_pe = 1.0 / (number_eigenvectors ** 0.5)
    bound_x = 1.0 / (node_features_size ** 0.5)
    return {
        "w_pe": jax.random.uniform(k1, (embedding_size, number_eigenvectors),
                                   jnp.float32, -bound_pe, bound_pe),
        "b_pe": jax.random.uniform(k2, (embedding_size,), jnp.float32, -bound_pe, bound_pe),
        "w_x": jax.random.uniform(k3, (embedding_size, node_features_size),
                                  jnp.float32, -bound_x, bound_x),
        "b_x": jax.random.uniform(k4, (embedding_size,), jnp.float32, -bound_x, bound_x),
    }


if __name__ == "__main__":
    key = jax.random.PRNGKey(0)
    B, N, F_, K, E = 2, 8, 6, 4, 32   # batch of graphs, nodes, feat size, eigvecs, embed size
    kp, kf, ka = jax.random.split(key, 3)

    params = init_params(kp, F_, K, E)
    node_features = jax.random.normal(kf, (B, N, F_), dtype=jnp.float32)

    # Random symmetric adjacency with a ring added so no node is isolated.
    rand = jax.random.uniform(ka, (B, N, N))
    upper = jnp.triu(jnp.where(rand > 0.6, 1.0, 0.0), k=1)
    ring = jnp.roll(jnp.eye(N), 1, axis=1)
    adj = upper + jnp.transpose(upper, (0, 2, 1)) + (ring + ring.T)[None]
    adj = jnp.clip(adj, 0.0, 1.0).astype(jnp.float32)

    emb, adj_out = laplacian_graph_embeddings(node_features, adj, params, K)
    jax.block_until_ready((emb, adj_out))

    assert emb.shape == (B, N, E) and emb.dtype == jnp.float32
    assert adj_out.shape == (B, N, N)

    # Reference check against plain-JAX forward (same PE path / eigh convention).
    deg = jnp.sum(adj, axis=-1)
    inv_sqrt_d = jnp.where(deg > 0, 1.0 / jnp.sqrt(jnp.maximum(deg, 1e-12)), 0.0)
    lap = jnp.eye(N)[None] - adj * inv_sqrt_d[:, :, None] * inv_sqrt_d[:, None, :]
    _, vecs = jnp.linalg.eigh(lap)
    pe_ref = vecs[:, :, 1:K + 1]
    ref = (pe_ref @ params["w_pe"].T + params["b_pe"]
           + node_features @ params["w_x"].T + params["b_x"])
    assert jnp.allclose(emb, ref, atol=1e-4, rtol=1e-4)

    print("KERNEL_OK")
</pallas_src>

<mosaic_0001>
module attributes {stable_mosaic.version = 11 : i64} {
  func.func @_embed_kernel(%arg0: i32, %arg1: memref<8x4xf32, #tpu.memory_space<vmem>>, %arg2: memref<8x6xf32, #tpu.memory_space<vmem>>, %arg3: memref<4x32xf32, #tpu.memory_space<vmem>>, %arg4: memref<6x32xf32, #tpu.memory_space<vmem>>, %arg5: memref<1x32xf32, #tpu.memory_space<vmem>>, %arg6: memref<8x32xf32, #tpu.memory_space<vmem>>) attributes {dimension_semantics = [#tpu.dimension_semantics<parallel>], iteration_bounds = array<i64: 2>, scalar_prefetch = 0 : i64, scratch_operands = 0 : i64, tpu.core_type = #tpu.core_type<tc>, window_params = [{transform_indices = @transform_0, window_bounds = array<i64: 8, 4>}, {transform_indices = @transform_1, window_bounds = array<i64: 8, 6>}, {pipeline_mode = #tpu.pipeline_mode<synchronous>, transform_indices = @transform_2, window_bounds = array<i64: 4, 32>}, {pipeline_mode = #tpu.pipeline_mode<synchronous>, transform_indices = @transform_3, window_bounds = array<i64: 6, 32>}, {pipeline_mode = #tpu.pipeline_mode<synchronous>, transform_indices = @transform_4, window_bounds = array<i64: 1, 32>}, {transform_indices = @transform_5, window_bounds = array<i64: 8, 32>}]} {
    %c0 = arith.constant 0 : index
    %c0_0 = arith.constant 0 : index
    %0 = vector.load %arg1[%c0, %c0_0] : memref<8x4xf32, #tpu.memory_space<vmem>>, vector<8x4xf32>
    %c0_1 = arith.constant 0 : index
    %c0_2 = arith.constant 0 : index
    %1 = vector.load %arg3[%c0_1, %c0_2] : memref<4x32xf32, #tpu.memory_space<vmem>>, vector<4x32xf32>
    %cst = arith.constant dense<0.000000e+00> : vector<8x32xf32>
    %2 = tpu.matmul %0, %1, %cst {dimension_numbers = #tpu.dot_dimension_numbers<[1], [0], [0], [1], [0, 0, 1, 1], [], []>} : vector<8x4xf32>, vector<4x32xf32>, vector<8x32xf32> -> vector<8x32xf32>
    %c0_3 = arith.constant 0 : index
    %c0_4 = arith.constant 0 : index
    %3 = vector.load %arg2[%c0_3, %c0_4] : memref<8x6xf32, #tpu.memory_space<vmem>>, vector<8x6xf32>
    %c0_5 = arith.constant 0 : index
    %c0_6 = arith.constant 0 : index
    %4 = vector.load %arg4[%c0_5, %c0_6] : memref<6x32xf32, #tpu.memory_space<vmem>>, vector<6x32xf32>
    %cst_7 = arith.constant dense<0.000000e+00> : vector<8x32xf32>
    %5 = tpu.matmul %3, %4, %cst_7 {dimension_numbers = #tpu.dot_dimension_numbers<[1], [0], [0], [1], [0, 0, 1, 1], [], []>} : vector<8x6xf32>, vector<6x32xf32>, vector<8x32xf32> -> vector<8x32xf32>
    %6 = arith.addf %2, %5 : vector<8x32xf32>
    %c0_8 = arith.constant 0 : index
    %c0_9 = arith.constant 0 : index
    %7 = vector.load %arg5[%c0_8, %c0_9] : memref<1x32xf32, #tpu.memory_space<vmem>>, vector<1x32xf32>
    %8 = vector.broadcast %7 : vector<1x32xf32> to vector<8x32xf32>
    %9 = arith.addf %6, %8 : vector<8x32xf32>
    %c0_10 = arith.constant 0 : index
    %c0_11 = arith.constant 0 : index
    %10 = vector.load %arg6[%c0_10, %c0_11] : memref<8x32xf32, #tpu.memory_space<vmem>>, vector<8x32xf32>
    tpu.vector_store %arg6[%c0_10, %c0_11], %9 {strides = array<i32>} : memref<8x32xf32, #tpu.memory_space<vmem>>, vector<8x32xf32>,
    return
  }
  func.func @transform_0(%arg0: i32) -> (i32, i32) {
    %c0_i32 = arith.constant 0 : i32
    %c0_i32_0 = arith.constant 0 : i32
    return %arg0, %c0_i32 : i32, i32
  }
  func.func @transform_1(%arg0: i32) -> (i32, i32) {
    %c0_i32 = arith.constant 0 : i32
    %c0_i32_0 = arith.constant 0 : i32
    return %arg0, %c0_i32 : i32, i32
  }
  func.func @transform_2(%arg0: i32) -> (i32, i32) {
    %c0_i32 = arith.constant 0 : i32
    %c0_i32_0 = arith.constant 0 : i32
    %c0_i32_1 = arith.constant 0 : i32
    return %c0_i32, %c0_i32_0 : i32, i32
  }
  func.func @transform_3(%arg0: i32) -> (i32, i32) {
    %c0_i32 = arith.constant 0 : i32
    %c0_i32_0 = arith.constant 0 : i32
    %c0_i32_1 = arith.constant 0 : i32
    return %c0_i32, %c0_i32_0 : i32, i32
  }
  func.func @transform_4(%arg0: i32) -> (i32, i32) {
    %c0_i32 = arith.constant 0 : i32
    %c0_i32_0 = arith.constant 0 : i32
    %c0_i32_1 = arith.constant 0 : i32
    return %c0_i32, %c0_i32_0 : i32, i32
  }
  func.func @transform_5(%arg0: i32) -> (i32, i32) {
    %c0_i32 = arith.constant 0 : i32
    %c0_i32_0 = arith.constant 0 : i32
    return %arg0, %c0_i32 : i32, i32
  }
}

</mosaic_0001>

<llo_original>
// kernel: tpu_custom_call.1
$region0: #{tpu_custom_call.1}
  #allocation0 [shape = 'u32[]', space=smem, size = 0x4, offset = 0x4, fixed_abs, tag = 'smem constant byte address 0x4 - core index']
  #allocation1 [shape = 'u32[144,128]{1,0:T(1,128)}', space=vmem, size = 0x12000, scoped, tag = 'internal scratch']
  %s0 = inlined_call_operand.vmem [shape: f32[16,4], index: 0, kind: input, shape index: {}]
  %s1 = inlined_call_operand.vmem [shape: f32[16,6], index: 1, kind: input, shape index: {}]
  %s2 = inlined_call_operand.vmem [shape: f32[4,32], index: 2, kind: input, shape index: {}]
  %s3 = inlined_call_operand.vmem [shape: f32[6,32], index: 3, kind: input, shape index: {}]
  %s4 = inlined_call_operand.vmem [shape: f32[1,32], index: 4, kind: input, shape index: {}]
  %s5 = inlined_call_operand.hbm [shape: f32[16,32], index: 5, kind: output, shape index: {}]
  %s6 = sld [smem:[#allocation0]]
  $region53: #{tpu_custom_call.1} parent=0
    _
  %s8 = ssub.s32 1, %s6
  %s9 = scalar_select 0, %s8, %s6
  $region1: #{tpu_custom_call.1} parent=0
    #allocation2 [shape = 'u8[8192]{0}', space=vmem, size = 0x2000, scoped, tag = 'output window, operand 0']
    #allocation3 [shape = 's32[2]{0}', space=sflag, size = 0x8, scoped, tag = 'scoped memory for tpu_custom_call.1']
    %10 = vsyncpa [#allocation3], 0
    %s11 = scalar_lea.sflag [#allocation3], 1
    %12 = vsyncpa %s11, 0
    loop: start=0, step=1, limit=4
    $region2: #{tpu_custom_call.1} parent=1 // loop_pre_header
      _
    $region3: #{tpu_custom_call.1} parent=1 // loop_header
      %s14 = sphi 0, %s18
      %p15 = scmp.ge.s32.totalorder %s14, 4
      %s24 = sphi 0, %s26
      %s27 = sphi 0, %s24
      %s28 = sphi 0, %s27
      %s44 = sphi 0, %s28
      %s50 = sphi 0, %s52
      %s53 = sphi 0, %s50
      %s54 = sphi 0, %s53
      %s70 = sphi 0, %s54
      %s74 = sphi 0, %s74
      %s76 = sphi 0, %s74
      %s77 = sphi 0, %s76
      %s91 = sphi 0, %s77
      %s95 = sphi 0, %s95
      %s97 = sphi 0, %s95
      %s98 = sphi 0, %s97
      %s112 = sphi 0, %s98
      %s116 = sphi 0, %s116
      %s118 = sphi 0, %s116
      %s119 = sphi 0, %s118
      %s133 = sphi 0, %s119
      %s139 = sphi 0, %s141
      %s142 = sphi 0, %s139
      %s143 = sphi 0, %s142
      %s159 = sphi 0, %s143
    $region4: #{tpu_custom_call.1} parent=1 // loop_header_branch
      %17 = sbr.rel (%p15) target = $region8
    $region5: #{tpu_custom_call.1} parent=1 // loop_body
      %s19 = ssub.s32 %s14, 1
      %s20 = ssub.s32 %s14, 2
      %s21 = sadd.s32 %s14, 1
      %s22 = ssub.s32 %s14, %s21
      %p23 = scmp.eq.s32.totalorder %s22, 0
      %s25 = sadd.s32 %s24, 1
      %s26 = scalar_select %p23, %s24, %s25
      %p29 = pneg %p23
      %p30 = scmp.eq.s32.totalorder %s14, 1
      %p31 = por %p29, %p30
      %p32 = scmp.ne.s32.totalorder %s24, %s27
      %p33 = scmp.eq.s32.totalorder %s14, 0
      %p34 = por %p32, %p33
      %p35 = scmp.ne.s32.totalorder %s24, %s27
      %p36 = scmp.eq.s32.totalorder %s19, 1
      %p37 = por %p35, %p36
      %p38 = scmp.ne.s32.totalorder %s27, %s28
      %p39 = scmp.eq.s32.totalorder %s19, 0
      %p40 = por %p38, %p39
      %p41 = scmp.ne.s32.totalorder %s27, %s28
      %p42 = scmp.eq.s32.totalorder %s20, 1
      %p43 = por %p41, %p42
      %p45 = scmp.ne.s32.totalorder %s28, %s44
      %p46 = scmp.eq.s32.totalorder %s20, 0
      %p47 = por %p45, %p46
      %s48 = ssub.s32 %s14, %s21
      %p49 = scmp.eq.s32.totalorder %s48, 0
      %s51 = sadd.s32 %s50, 1
      %s52 = scalar_select %p49, %s50, %s51
      %p55 = pneg %p49
      %p56 = scmp.eq.s32.totalorder %s14, 1
      %p57 = por %p55, %p56
      %p58 = scmp.ne.s32.totalorder %s50, %s53
      %p59 = scmp.eq.s32.totalorder %s14, 0
      %p60 = por %p58, %p59
      %p61 = scmp.ne.s32.totalorder %s50, %s53
      %p62 = scmp.eq.s32.totalorder %s19, 1
      %p63 = por %p61, %p62
      %p64 = scmp.ne.s32.totalorder %s53, %s54
      %p65 = scmp.eq.s32.totalorder %s19, 0
      %p66 = por %p64, %p65
      %p67 = scmp.ne.s32.totalorder %s53, %s54
      %p68 = scmp.eq.s32.totalorder %s20, 1
      %p69 = por %p67, %p68
      %p71 = scmp.ne.s32.totalorder %s54, %s70
      %p72 = scmp.eq.s32.totalorder %s20, 0
      %p73 = por %p71, %p72
      %s75 = sadd.s32 %s74, 1
      %p78 = scmp.eq.s32.totalorder %s14, 1
      %p79 = scmp.ne.s32.totalorder %s74, %s76
      %p80 = scmp.eq.s32.totalorder %s14, 0
      %p81 = por %p79, %p80
      %p82 = scmp.ne.s32.totalorder %s74, %s76
      %p83 = scmp.eq.s32.totalorder %s19, 1
      %p84 = por %p82, %p83
      %p85 = scmp.ne.s32.totalorder %s76, %s77
      %p86 = scmp.eq.s32.totalorder %s19, 0
      %p87 = por %p85, %p86
      %p88 = scmp.ne.s32.totalorder %s76, %s77
      %p89 = scmp.eq.s32.totalorder %s20, 1
      %p90 = por %p88, %p89
      %p92 = scmp.ne.s32.totalorder %s77, %s91
      %p93 = scmp.eq.s32.totalorder %s20, 0
      %p94 = por %p92, %p93
      %s96 = sadd.s32 %s95, 1
      %p99 = scmp.eq.s32.totalorder %s14, 1
      %p100 = scmp.ne.s32.totalorder %s95, %s97
      %p101 = scmp.eq.s32.totalorder %s14, 0
      %p102 = por %p100, %p101
      %p103 = scmp.ne.s32.totalorder %s95, %s97
      %p104 = scmp.eq.s32.totalorder %s19, 1
      %p105 = por %p103, %p104
      %p106 = scmp.ne.s32.totalorder %s97, %s98
      %p107 = scmp.eq.s32.totalorder %s19, 0
      %p108 = por %p106, %p107
      %p109 = scmp.ne.s32.totalorder %s97, %s98
      %p110 = scmp.eq.s32.totalorder %s20, 1
      %p111 = por %p109, %p110
      %p113 = scmp.ne.s32.totalorder %s98, %s112
      %p114 = scmp.eq.s32.totalorder %s20, 0
      %p115 = por %p113, %p114
      %s117 = sadd.s32 %s116, 1
      %p120 = scmp.eq.s32.totalorder %s14, 1
      %p121 = scmp.ne.s32.totalorder %s116, %s118
      %p122 = scmp.eq.s32.totalorder %s14, 0
      %p123 = por %p121, %p122
      %p124 = scmp.ne.s32.totalorder %s116, %s118
      %p125 = scmp.eq.s32.totalorder %s19, 1
      %p126 = por %p124, %p125
      %p127 = scmp.ne.s32.totalorder %s118, %s119
      %p128 = scmp.eq.s32.totalorder %s19, 0
      %p129 = por %p127, %p128
      %p130 = scmp.ne.s32.totalorder %s118, %s119
      %p131 = scmp.eq.s32.totalorder %s20, 1
      %p132 = por %p130, %p131
      %p134 = scmp.ne.s32.totalorder %s119, %s133
      %p135 = scmp.eq.s32.totalorder %s20, 0
      %p136 = por %p134, %p135
      %s137 = ssub.s32 %s14, %s21
      %p138 = scmp.eq.s32.totalorder %s137, 0
      %s140 = sadd.s32 %s139, 1
      %s141 = scalar_select %p138, %s139, %s140
      %p144 = pneg %p138
      %p145 = scmp.eq.s32.totalorder %s14, 1
      %p146 = por %p144, %p145
      %p147 = scmp.ne.s32.totalorder %s139, %s142
      %p148 = scmp.eq.s32.totalorder %s14, 0
      %p149 = por %p147, %p148
      %p150 = scmp.ne.s32.totalorder %s139, %s142
      %p151 = scmp.eq.s32.totalorder %s19, 1
      %p152 = por %p150, %p151
      %p153 = scmp.ne.s32.totalorder %s142, %s143
      %p154 = scmp.eq.s32.totalorder %s19, 0
      %p155 = por %p153, %p154
      %p156 = scmp.ne.s32.totalorder %s142, %s143
      %p157 = scmp.eq.s32.totalorder %s20, 1
      %p158 = por %p156, %p157
      %p160 = scmp.ne.s32.totalorder %s143, %s159
      %p161 = scmp.eq.s32.totalorder %s20, 0
      %p162 = por %p160, %p161
      %p163 = scmp.le.s32.totalorder 1, %s14
      %p164 = scmp.lt.s32.totalorder %s14, 3
      %p165 = pnand %p163, %p164
      %p166 = pneg %p165
      // Predicated region
      $region9: #{tpu_custom_call.1} parent=5 // pred_check
        _
      $region10: #{tpu_custom_call.1} parent=5 // pred_check_branch
        %168 = sbr.rel (%p165) target = $region12
      $region11: #{tpu_custom_call.1} parent=5 // pred_region
        %s169 = ssub.s32 %s14, 1
        // Predicated region
        $region13: #{tpu_custom_call.1} parent=11 // pred_check
          %p170 = pneg %p87
        $region14: #{tpu_custom_call.1} parent=11 // pred_check_branch
          %172 = sbr.rel (%p170) target = $region16
        $region15: #{tpu_custom_call.1} parent=11 // pred_region
          _
        $region16: #{tpu_custom_call.1} parent=11 // pred_fallthru
          _
        // Predicated region
        $region17: #{tpu_custom_call.1} parent=11 // pred_check
          %p173 = pneg %p108
        $region18: #{tpu_custom_call.1} parent=11 // pred_check_branch
          %175 = sbr.rel (%p173) target = $region20
        $region19: #{tpu_custom_call.1} parent=11 // pred_region
          _
        $region20: #{tpu_custom_call.1} parent=11 // pred_fallthru
          _
        // Predicated region
        $region21: #{tpu_custom_call.1} parent=11 // pred_check
          %p176 = pneg %p129
        $region22: #{tpu_custom_call.1} parent=11 // pred_check_branch
          %178 = sbr.rel (%p176) target = $region24
        $region23: #{tpu_custom_call.1} parent=11 // pred_region
          _
        $region24: #{tpu_custom_call.1} parent=11 // pred_fallthru
          _
      $region12: #{tpu_custom_call.1} parent=5 // pred_fallthru
        _
      %p179 = scmp.lt.s32.totalorder %s14, 2
      // Predicated region
      $region25: #{tpu_custom_call.1} parent=5 // pred_check
        %p180 = pneg %p179
      $region26: #{tpu_custom_call.1} parent=5 // pred_check_branch
        %182 = sbr.rel (%p180) target = $region28
      $region27: #{tpu_custom_call.1} parent=5 // pred_region
        // Predicated region
        $region29: #{tpu_custom_call.1} parent=27 // pred_check
          %p183 = pneg %p34
        $region30: #{tpu_custom_call.1} parent=27 // pred_check_branch
          %185 = sbr.rel (%p183) target = $region32
        $region31: #{tpu_custom_call.1} parent=27 // pred_region
          %p186 = scmp.lt.s32.totalorder %s14, 1
          %s187 = scalar_select %p186, %s14, 1
          %s188 = smul.addr %s187, 8
          %s189 = scalar_lea.vmem %s0, %s188
        $region32: #{tpu_custom_call.1} parent=27 // pred_fallthru
          _
        // Predicated region
        $region33: #{tpu_custom_call.1} parent=27 // pred_check
          %p190 = pneg %p60
        $region34: #{tpu_custom_call.1} parent=27 // pred_check_branch
          %192 = sbr.rel (%p190) target = $region36
        $region35: #{tpu_custom_call.1} parent=27 // pred_region
          %p193 = scmp.lt.s32.totalorder %s14, 1
          %s194 = scalar_select %p193, %s14, 1
          %s195 = smul.addr %s194, 8
          %s196 = scalar_lea.vmem %s1, %s195
        $region36: #{tpu_custom_call.1} parent=27 // pred_fallthru
          _
      $region28: #{tpu_custom_call.1} parent=5 // pred_fallthru
        _
      %p197 = scmp.le.s32.totalorder 1, %s14
      %p198 = scmp.lt.s32.totalorder %s14, 3
      %p199 = pnand %p197, %p198
      %p200 = pneg %p199
      // Predicated region
      $region37: #{tpu_custom_call.1} parent=5 // pred_check
        _
      $region38: #{tpu_custom_call.1} parent=5 // pred_check_branch
        %202 = sbr.rel (%p199) target = $region40
      $region39: #{tpu_custom_call.1} parent=5 // pred_region
        %s203 = ssub.s32 %s14, 1
        %p204 = scmp.lt.s32.totalorder %s19, 1
        %s205 = scalar_select %p204, %s19, 1
        %s206 = smul.addr %s205, 8
        %s207 = scalar_lea.vmem %s0, %s206
        %p208 = pneg %p40
        %p209 = pneg %p37
        %p210 = scmp.lt.s32.totalorder %s19, 1
        %s211 = scalar_select %p210, %s19, 1
        %s212 = smul.addr %s211, 8
        %s213 = scalar_lea.vmem %s1, %s212
        %p214 = pneg %p66
        %p215 = pneg %p63
        %p216 = pneg %p87
        %p217 = pneg %p84
        %p218 = pneg %p108
        %p219 = pneg %p105
        %p220 = pneg %p129
        %p221 = pneg %p126
        %p222 = pneg %p155
        %p223 = pneg %p152
        %s224 = sand.u32 %s142, 1
        %s225 = scalar_lea.sflag [#allocation3], %s224
        %s226 = sand.u32 %s142, 1
        %s227 = smul.addr %s226, 8
        %s228 = scalar_lea.vmem [#allocation2], %s227
        %p229 = scmp.lt.s32.totalorder %s19, 1
        %s230 = scalar_select %p229, %s19, 1
        %s231 = smul.addr %s230, 8
        %s232 = scalar_lea.vmem %s0, %s231
        %p233 = scmp.lt.s32.totalorder %s19, 1
        %s234 = scalar_select %p233, %s19, 1
        %s235 = smul.addr %s234, 8
        %s236 = scalar_lea.vmem %s1, %s235
        %v237 = vld [vmem:[%s232] sm:$0xff]
        %v238 = vld [vmem:[%s2] sm:$0xf]
        %v239 = vld [vmem:[%s236] sm:$0xff]
        %v240 = vld [vmem:[%s3] sm:$0x3f]
        %vm241 = vcmask 48128
        %v243 = vsel %vm241, %v239, 0
        %vm245 = vcmask 1045504
        %v247 = vsel %vm245, %v240, 0
        %249 = vmatprep.subr.mxu0 0.0
        %250 = vmatpush1.msra.mxu0 %v247
        %251 = vmatprep.subr.mxu0 0.0
        %252 = vmatpush1.msra.mxu0 0.0
        %253 = vmatprep.subr.mxu0 0.0
        %254 = vmatpush1.msra.mxu0 0.0
        %255 = vmatprep.subr.mxu0 0.0
        %256 = vmatpush1.msra.mxu0 0.0
        %257 = vmatprep.subr.mxu0 0.0
        %258 = vmatpush1.msra.mxu0 0.0
        %259 = vmatprep.subr.mxu0 0.0
        %260 = vmatpush1.msra.mxu0 0.0
        %261 = vmatprep.subr.mxu0 0.0
        %262 = vmatpush1.msra.mxu0 0.0
        %263 = vmatprep.subr.mxu0 0.0
        %264 = vmatpush1.msra.mxu0 0.0
        %265 = vmatprep.subr.mxu0 0.0
        %266 = vmatpush1.msra.mxu0 0.0
        %267 = vmatprep.subr.mxu0 0.0
        %268 = vmatpush1.msra.mxu0 0.0
        %269 = vmatprep.subr.mxu0 0.0
        %270 = vmatpush1.msra.mxu0 0.0
        %271 = vmatprep.subr.mxu0 0.0
        %272 = vmatpush1.msra.mxu0 0.0
        %273 = vmatprep.subr.mxu0 0.0
        %274 = vmatpush1.msra.mxu0 0.0
        %275 = vmatprep.subr.mxu0 0.0
        %276 = vmatpush1.msra.mxu0 0.0
        %277 = vmatprep.subr.mxu0 0.0
        %278 = vmatpush1.msra.mxu0 0.0
        %279 = vmatprep.subr.mxu0 0.0
        %280 = vmatpush1.msra.mxu0 0.0
        %281 = vmatprep.subr.mxu0 0.0
        %282 = vmatpush1.msra.mxu0 0.0
        %283 = vmatprep.subr.mxu0 0.0
        %284 = vmatpush1.msra.mxu0 0.0
        %285 = vmatprep.subr.mxu0 0.0
        %286 = vmatpush1.msra.mxu0 0.0
        %287 = vmatprep.subr.mxu0 0.0
        %288 = vmatpush1.msra.mxu0 0.0
        %289 = vmatprep.subr.mxu0 0.0
        %290 = vmatpush1.msra.mxu0 0.0
        %291 = vmatprep.subr.mxu0 0.0
        %292 = vmatpush1.msra.mxu0 0.0
        %293 = vmatprep.subr.mxu0 0.0
        %294 = vmatpush1.msra.mxu0 0.0
        %295 = vmatprep.subr.mxu0 0.0
        %296 = vmatpush1.msra.mxu0 0.0
        %297 = vmatprep.subr.mxu0 0.0
        %298 = vmatpush1.msra.mxu0 0.0
        %299 = vmatprep.subr.mxu0 0.0
        %300 = vmatpush1.msra.mxu0 0.0
        %301 = vmatprep.subr.mxu0 0.0
        %302 = vmatpush1.msra.mxu0 0.0
        %303 = vmatprep.subr.mxu0 0.0
        %304 = vmatpush1.msra.mxu0 0.0
        %305 = vmatprep.subr.mxu0 0.0
        %306 = vmatpush1.msra.mxu0 0.0
        %307 = vmatprep.subr.mxu0 0.0
        %308 = vmatpush1.msra.mxu0 0.0
        %309 = vmatprep.subr.mxu0 0.0
        %310 = vmatpush1.msra.mxu0 0.0
        %311 = vmatprep.subr.mxu0 0.0
        %312 = vmatpush1.msra.mxu0 0.0
        %313 = vmatprep.mubr.f32.mxu0 0.0
        %314 = vmatmul.mubr.f32.gmra.mrb[0].mxu0 %v243
        %v315 = vpop.f32.mrb[0].mxu0
        %v316 = vadd.f32 0.0, %v315
        %v317 = vpop.f32.mrb[0].mxu0
        %318 = vdwg.mxu0
        %vm319 = vcmask 31744
        %v321 = vsel %vm319, %v237, 0
        %vm323 = vcmask 1043456
        %v325 = vsel %vm323, %v238, 0
        %327 = vmatprep.subr.mxu0 0.0
        %328 = vmatpush1.msra.mxu0 %v325
        %329 = vmatprep.subr.mxu0 0.0
        %330 = vmatpush1.msra.mxu0 0.0
        %331 = vmatprep.subr.mxu0 0.0
        %332 = vmatpush1.msra.mxu0 0.0
        %333 = vmatprep.subr.mxu0 0.0
        %334 = vmatpush1.msra.mxu0 0.0
        %335 = vmatprep.subr.mxu0 0.0
        %336 = vmatpush1.msra.mxu0 0.0
        %337 = vmatprep.subr.mxu0 0.0
        %338 = vmatpush1.msra.mxu0 0.0
        %339 = vmatprep.subr.mxu0 0.0
        %340 = vmatpush1.msra.mxu0 0.0
        %341 = vmatprep.subr.mxu0 0.0
        %342 = vmatpush1.msra.mxu0 0.0
        %343 = vmatprep.subr.mxu0 0.0
        %344 = vmatpush1.msra.mxu0 0.0
        %345 = vmatprep.subr.mxu0 0.0
        %346 = vmatpush1.msra.mxu0 0.0
        %347 = vmatprep.subr.mxu0 0.0
        %348 = vmatpush1.msra.mxu0 0.0
        %349 = vmatprep.subr.mxu0 0.0
        %350 = vmatpush1.msra.mxu0 0.0
        %351 = vmatprep.subr.mxu0 0.0
        %352 = vmatpush1.msra.mxu0 0.0
        %353 = vmatprep.subr.mxu0 0.0
        %354 = vmatpush1.msra.mxu0 0.0
        %355 = vmatprep.subr.mxu0 0.0
        %356 = vmatpush1.msra.mxu0 0.0
        %357 = vmatprep.subr.mxu0 0.0
        %358 = vmatpush1.msra.mxu0 0.0
        %359 = vmatprep.subr.mxu0 0.0
        %360 = vmatpush1.msra.mxu0 0.0
        %361 = vmatprep.subr.mxu0 0.0
        %362 = vmatpush1.msra.mxu0 0.0
        %363 = vmatprep.subr.mxu0 0.0
        %364 = vmatpush1.msra.mxu0 0.0
        %365 = vmatprep.subr.mxu0 0.0
        %366 = vmatpush1.msra.mxu0 0.0
        %367 = vmatprep.subr.mxu0 0.0
        %368 = vmatpush1.msra.mxu0 0.0
        %369 = vmatprep.subr.mxu0 0.0
        %370 = vmatpush1.msra.mxu0 0.0
        %371 = vmatprep.subr.mxu0 0.0
        %372 = vmatpush1.msra.mxu0 0.0
        %373 = vmatprep.subr.mxu0 0.0
        %374 = vmatpush1.msra.mxu0 0.0
        %375 = vmatprep.subr.mxu0 0.0
        %376 = vmatpush1.msra.mxu0 0.0
        %377 = vmatprep.subr.mxu0 0.0
        %378 = vmatpush1.msra.mxu0 0.0
        %379 = vmatprep.subr.mxu0 0.0
        %380 = vmatpush1.msra.mxu0 0.0
        %381 = vmatprep.subr.mxu0 0.0
        %382 = vmatpush1.msra.mxu0 0.0
        %383 = vmatprep.subr.mxu0 0.0
        %384 = vmatpush1.msra.mxu0 0.0
        %385 = vmatprep.subr.mxu0 0.0
        %386 = vmatpush1.msra.mxu0 0.0
        %387 = vmatprep.subr.mxu0 0.0
        %388 = vmatpush1.msra.mxu0 0.0
        %389 = vmatprep.subr.mxu0 0.0
        %390 = vmatpush1.msra.mxu0 0.0
        %391 = vmatprep.mubr.f32.mxu0 0.0
        %392 = vmatmul.mubr.f32.gmra.mrb[0].mxu0 %v321
        %v393 = vpop.f32.mrb[0].mxu0
        %v394 = vadd.f32 %v316, %v393
        %v395 = vpop.f32.mrb[0].mxu0
        %396 = vdwg.mxu0
        %v397 = vld [vmem:[%s4] sm:$0x1]
        %v399 = vlaneseq
        %v400 = vshrl.u32 %v399, 7
        %v401 = vsub.s32 0, %v400
        %v402 = vrot.slane %v397, %v401
        %v404 = vadd.f32 %v394, %v402
        %vm405 = vcmask 261120
        %406 = vst.msk [vmem:[%s228] sm:$0xff] %vm405, %v404
        %s407 = sand.u32 %s142, 1
        %s408 = scalar_lea.sflag [#allocation3], %s407
        %s409 = sand.u32 %s142, 1
        %s410 = smul.addr %s409, 8
        %s411 = scalar_lea.vmem [#allocation2], %s410
        // Predicated region
        $region41: #{tpu_custom_call.1} parent=39 // pred_check
          %p412 = pneg %p152
        $region42: #{tpu_custom_call.1} parent=39 // pred_check_branch
          %414 = sbr.rel (%p412) target = $region44
        $region43: #{tpu_custom_call.1} parent=39 // pred_region
          %s416 = ssub.s32 128, 128
          %417 = vsyncadd %s408, %s416
          %s418 = smul.addr %s19, 128
          %s419 = scalar_lea.hbm %s5, %s418
          %s421 = sshll.u32 %s411, 4
          %s422 = int_to_ptr.vmem [resolvable:$true] %s421
          %424 = dma.vmem_to_hbm [thread:$0]  %s422, 128, %s419, %s408
        $region44: #{tpu_custom_call.1} parent=39 // pred_fallthru
          _
      $region40: #{tpu_custom_call.1} parent=5 // pred_fallthru
        _
      %p425 = scmp.le.s32.totalorder 2, %s14
      // Predicated region
      $region45: #{tpu_custom_call.1} parent=5 // pred_check
        %p426 = pneg %p425
      $region46: #{tpu_custom_call.1} parent=5 // pred_check_branch
        %428 = sbr.rel (%p426) target = $region48
      $region47: #{tpu_custom_call.1} parent=5 // pred_region
        %s429 = ssub.s32 %s14, 2
        // Predicated region
        $region49: #{tpu_custom_call.1} parent=47 // pred_check
          %p430 = pneg %p158
        $region50: #{tpu_custom_call.1} parent=47 // pred_check_branch
          %432 = sbr.rel (%p430) target = $region52
        $region51: #{tpu_custom_call.1} parent=47 // pred_region
          %s433 = sand.u32 %s143, 1
          %s434 = scalar_lea.sflag [#allocation3], %s433
          %s435 = sand.u32 %s143, 1
          %s436 = smul.addr %s435, 8
          %s437 = scalar_lea.vmem [#allocation2], %s436
          %438 = dma.done %s434, 128
        $region52: #{tpu_custom_call.1} parent=47 // pred_fallthru
          _
      $region48: #{tpu_custom_call.1} parent=5 // pred_fallthru
        _
    $region6: #{tpu_custom_call.1} parent=1 // loop_footer
      %s18 = sadd.s32 1, %s14
    $region7: #{tpu_custom_call.1} parent=1 // loop_footer_branch
      %13 = sbr.rel target = $region3
    $region8: #{tpu_custom_call.1} parent=1 // loop_exit
      _
    %439 = vsyncpa [#allocation3], 1
    %s440 = scalar_lea.sflag [#allocation3], 1
    %441 = vsyncpa %s440, 1

</llo_original>
